<compile_context>
chip_gen: v7x
topology: tpu7x:2x2x1
jax: 0.10.0
libtpu: 0.0.40
codegen_flags: <defaults>
</compile_context>

<pallas_src>
import functools

import jax
import jax.numpy as jnp
from jax import lax
from jax.experimental import pallas as pl
from jax.experimental.pallas import tpu as pltpu

LANES = 128
MAX_BLOCK_ROWS = 4096          # 4096*128*4B = 2 MiB per f32 input block/buffer
VMEM_LIMIT_BYTES = 32 * 1024 * 1024   # >= default scoped, <= physical on all gens


def _largest_divisor_leq(n, cap):
    cap = max(1, min(n, cap))
    for d in range(cap, 0, -1):
        if n % d == 0:
            return d
    return 1


def _pbce_kernel(pred_ref, tgt_ref, bce_acc_ref, cnt_acc_ref, *,
                 block_rows, acc_rows, rows_total, needs_row_mask):
    """One (class, batch-block, chunk) step: masked BCE-with-logits partials."""
    b = pl.program_id(1)
    k = pl.program_id(2)

    # Output blocks are revisited across (b, k) for a fixed class -> they act
    # as per-class accumulators resident in VMEM.  Zero them on the first step.
    @pl.when((b == 0) & (k == 0))
    def _():
        bce_acc_ref[...] = jnp.zeros_like(bce_acc_ref)
        cnt_acc_ref[...] = jnp.zeros_like(cnt_acc_ref)

    x = pred_ref[...].astype(jnp.float32)   # (BB, block_rows, 128)
    z = tgt_ref[...].astype(jnp.float32)

    def accumulate(row_mask):
        valid = z != -1.0
        if row_mask is not None:
            valid = valid & row_mask
        # Select BEFORE the math so ignored / out-of-bounds elements cannot
        # produce inf/NaN that leaks into the sum (final where re-zeroes).
        xs = jnp.where(valid, x, 0.0)
        # BCEWithLogitsLoss (reduction='none'), numerically-stable form.
        loss = jnp.maximum(xs, 0.0) - xs * z + jnp.log1p(jnp.exp(-jnp.abs(xs)))
        loss = jnp.where(valid, loss, 0.0)
        cnt = valid.astype(jnp.float32)

        # (BB, block_rows, 128) -> (block_rows, 128): cheap adds over the
        # batch-block axis (non-minor axis, pure VPU work).
        loss2 = loss.sum(axis=0)
        cnt2 = cnt.sum(axis=0)
        if acc_rows != block_rows:
            # Tile-aligned fold (block_rows % 8 == 0) down to one vreg (8,128):
            # elementwise vreg adds only, no cross-lane work in the hot loop.
            fold = block_rows // acc_rows
            loss2 = loss2.reshape(fold, acc_rows, LANES).sum(axis=0)
            cnt2 = cnt2.reshape(fold, acc_rows, LANES).sum(axis=0)
        bce_acc_ref[...] += loss2
        cnt_acc_ref[...] += cnt2

    if needs_row_mask:
        last = pl.num_programs(2) - 1

        @pl.when(k != last)
        def _():
            accumulate(None)              # mask-free hot path

        @pl.when(k == last)
        def _():
            # Only the last chunk can contain out-of-bounds (garbage) rows.
            row_ids = lax.broadcasted_iota(jnp.int32, x.shape, dimension=1)
            in_bounds = (k * block_rows + row_ids) < rows_total
            accumulate(in_bounds)
    else:
        accumulate(None)


def pbce_loss(predict, target, num_classes=4, max_block_rows=MAX_BLOCK_ROWS,
              core_parallel_classes=False):
    assert predict.shape == target.shape, "predict & target shape do not match"
    B, C, D, H, W = predict.shape
    assert C == num_classes
    M = D * H * W
    rows = -(-M // LANES)

    # Free views of the contiguous NCDHW layout; NO dtype cast on the host --
    # the kernel streams the caller's native dtype and casts per block.
    pred = predict.reshape(B, C, M)
    tgt = target.reshape(B, C, M)

    if rows * LANES != M:
        # Rare ragged case (M % 128 != 0).  Predictions pad with 0, targets
        # pad with the ignore label -1 so padded elements contribute neither
        # loss nor valid count -> no per-element lane mask in the kernel.
        # TODO(synk): this is one extra HBM pass; a fully copy-free ragged
        # path needs a manual-DMA kernel over the un-padded (B, C, M) layout.
        pad = rows * LANES - M
        pred = jnp.pad(pred, ((0, 0), (0, 0), (0, pad)))
        tgt = jnp.pad(tgt, ((0, 0), (0, 0), (0, pad)), constant_values=-1)

    pred4 = pred.reshape(B, C, rows, LANES)   # free view
    tgt4 = tgt.reshape(B, C, rows, LANES)

    # Block / grid selection: big slabs to amortize the ~0.35 us/step pipeline
    # overhead.  For small volumes, fold several batch elements per step.
    if rows >= max_block_rows:
        tr = max_block_rows                      # multiple of 32 (bf16/int8 safe)
        bb = 1
    else:
        tr = rows                                # full dim -> no tiling constraint
        bb = _largest_divisor_leq(B, max_block_rows // max(tr, 1))
    n_chunks = -(-rows // tr)
    needs_row_mask = (rows % tr) != 0
    acc_rows = 8 if tr % 8 == 0 else tr

    kernel = functools.partial(
        _pbce_kernel, block_rows=tr, acc_rows=acc_rows,
        rows_total=rows, needs_row_mask=needs_row_mask)

    grid_spec = pltpu.PrefetchScalarGridSpec(
        num_scalar_prefetch=0,
        grid=(C, B // bb, n_chunks),
        in_specs=[
            pl.BlockSpec((bb, None, tr, LANES), lambda c, b, k: (b, c, k, 0)),
            pl.BlockSpec((bb, None, tr, LANES), lambda c, b, k: (b, c, k, 0)),
        ],
        out_specs=[
            pl.BlockSpec((None, acc_rows, LANES), lambda c, b, k: (c, 0, 0)),
            pl.BlockSpec((None, acc_rows, LANES), lambda c, b, k: (c, 0, 0)),
        ],
    )

    # Class axis leads the grid so it can shard across TensorCores on v7x.
    if core_parallel_classes:
        class_sem = pltpu.CORE_PARALLEL
    else:
        class_sem = "parallel"

    n_elem = B * C * M
    in_bytes = n_elem * (predict.dtype.itemsize + target.dtype.itemsize)

    bce_acc, cnt_acc = pl.pallas_call(
        kernel,
        out_shape=(
            jax.ShapeDtypeStruct((C, acc_rows, LANES), jnp.float32),
            jax.ShapeDtypeStruct((C, acc_rows, LANES), jnp.float32),
        ),
        grid_spec=grid_spec,
        compiler_params=pltpu.CompilerParams(
            dimension_semantics=(class_sem, "arbitrary", "arbitrary"),
            vmem_limit_bytes=VMEM_LIMIT_BYTES),
        cost_estimate=pl.CostEstimate(
            flops=8 * n_elem,
            transcendentals=2 * n_elem,
            bytes_accessed=in_bytes),
    )(pred4, tgt4)

    bce_sum = jnp.sum(bce_acc, axis=(1, 2))   # (C,) tiny epilogue reduce
    cnt_sum = jnp.sum(cnt_acc, axis=(1, 2))   # (C,) exact count of labeled voxels

    # sum_b mean_{d,h,w}(masked bce) == total_masked_sum / (D*H*W)
    class_loss = bce_sum / jnp.float32(M)
    # torch: class kept iff mean(target) != -1, i.e. iff any voxel is labeled
    # (targets live in {0, 1, -1}); counting is exact and order-independent.
    has_labels = cnt_sum > 0.0
    num = jnp.sum(jnp.where(has_labels, class_loss, 0.0))
    den = jnp.sum(has_labels.astype(jnp.float32))
    return num / den


def pbce_ref(predict, target):
    """Pure-JAX reference mirroring the PyTorch forward."""
    B, C, D, H, W = predict.shape
    losses = []
    for i in range(C):
        x = predict[:, i].astype(jnp.float32)
        z = target[:, i].astype(jnp.float32)
        ce = jnp.maximum(x, 0.0) - x * z + jnp.log1p(jnp.exp(-jnp.abs(x)))
        ce = ce * (z != -1.0).astype(jnp.float32)
        per_sample = jnp.mean(ce, axis=(1, 2, 3))
        valid = jnp.mean(z) != -1.0
        losses.append(jnp.where(valid, jnp.sum(per_sample), jnp.float32(jnp.nan)))
    tl = jnp.stack(losses)
    finite = tl == tl
    return jnp.sum(jnp.where(finite, tl, 0.0)) / jnp.sum(finite.astype(jnp.float32))


if __name__ == "__main__":
    key = jax.random.PRNGKey(0)
    k1, k2, k3 = jax.random.split(key, 3)
    B, C, D, H, W = 2, 4, 4, 16, 16

    predict = jax.random.normal(k1, (B, C, D, H, W), dtype=jnp.float32)
    target = (jax.random.uniform(k2, (B, C, D, H, W)) > 0.5).astype(jnp.float32)
    # partially-labelled class 1 (some voxels ignored with -1)
    ignore = jax.random.uniform(k3, (B, D, H, W)) > 0.7
    target = target.at[:, 1].set(jnp.where(ignore, -1.0, target[:, 1]))
    # class 3 fully ignored -> mean(target[:,3]) == -1 -> NaN -> filtered out
    target = target.at[:, 3].set(-1.0)

    out = jax.block_until_ready(pbce_loss(predict, target, num_classes=C))
    ref = jax.block_until_ready(pbce_ref(predict, target))

    assert jnp.isfinite(out), f"kernel produced non-finite loss: {out}"
    assert jnp.allclose(out, ref, rtol=1e-5, atol=1e-6), (out, ref)
    print("KERNEL_OK")
</pallas_src>

<mosaic_0001>
module attributes {stable_mosaic.version = 11 : i64} {
  func.func @_pbce_kernel(%arg0: i32, %arg1: i32, %arg2: i32, %arg3: memref<2x1x8x128xf32, #tpu.memory_space<vmem>>, %arg4: memref<2x1x8x128xf32, #tpu.memory_space<vmem>>, %arg5: memref<1x8x128xf32, #tpu.memory_space<vmem>>, %arg6: memref<1x8x128xf32, #tpu.memory_space<vmem>>) attributes {dimension_semantics = [#tpu.dimension_semantics<parallel>, #tpu.dimension_semantics<arbitrary>, #tpu.dimension_semantics<arbitrary>], iteration_bounds = array<i64: 4, 1, 1>, scalar_prefetch = 0 : i64, scratch_operands = 0 : i64, tpu.core_type = #tpu.core_type<tc>, window_params = [{transform_indices = @transform_0, window_bounds = array<i64: 2, 1, 8, 128>}, {transform_indices = @transform_1, window_bounds = array<i64: 2, 1, 8, 128>}, {transform_indices = @transform_2, window_bounds = array<i64: 1, 8, 128>}, {transform_indices = @transform_3, window_bounds = array<i64: 1, 8, 128>}]} {
    %c0_i32 = arith.constant 0 : i32
    %0 = arith.cmpi eq, %arg1, %c0_i32 : i32
    %c0_i32_0 = arith.constant 0 : i32
    %1 = arith.cmpi eq, %arg2, %c0_i32_0 : i32
    %2 = arith.andi %0, %1 : i1
    %3 = arith.extui %2 : i1 to i32
    %c0_i32_1 = arith.constant 0 : i32
    %4 = arith.cmpi ne, %3, %c0_i32_1 : i32
    scf.if %4 {
      %cst_27 = arith.constant 0.000000e+00 : f32
      %41 = vector.broadcast %cst_27 : f32 to vector<8x128xf32>
      %c0_28 = arith.constant 0 : index
      %c0_29 = arith.constant 0 : index
      %c0_30 = arith.constant 0 : index
      %42 = vector.load %arg5[%c0_28, %c0_29, %c0_30] : memref<1x8x128xf32, #tpu.memory_space<vmem>>, vector<1x8x128xf32>
      %43 = vector.shape_cast %42 : vector<1x8x128xf32> to vector<8x128xf32>
      %44 = vector.shape_cast %41 : vector<8x128xf32> to vector<1x8x128xf32>
      tpu.vector_store %arg5[%c0_28, %c0_29, %c0_30], %44 {strides = array<i32>} : memref<1x8x128xf32, #tpu.memory_space<vmem>>, vector<1x8x128xf32>,
      %cst_31 = arith.constant 0.000000e+00 : f32
      %45 = vector.broadcast %cst_31 : f32 to vector<8x128xf32>
      %c0_32 = arith.constant 0 : index
      %c0_33 = arith.constant 0 : index
      %c0_34 = arith.constant 0 : index
      %46 = vector.load %arg6[%c0_32, %c0_33, %c0_34] : memref<1x8x128xf32, #tpu.memory_space<vmem>>, vector<1x8x128xf32>
      %47 = vector.shape_cast %46 : vector<1x8x128xf32> to vector<8x128xf32>
      %48 = vector.shape_cast %45 : vector<8x128xf32> to vector<1x8x128xf32>
      tpu.vector_store %arg6[%c0_32, %c0_33, %c0_34], %48 {strides = array<i32>} : memref<1x8x128xf32, #tpu.memory_space<vmem>>, vector<1x8x128xf32>,
    } else {
    }
    %c0 = arith.constant 0 : index
    %c0_2 = arith.constant 0 : index
    %c0_3 = arith.constant 0 : index
    %c0_4 = arith.constant 0 : index
    %5 = vector.load %arg3[%c0, %c0_2, %c0_3, %c0_4] : memref<2x1x8x128xf32, #tpu.memory_space<vmem>>, vector<2x1x8x128xf32>
    %6 = vector.shape_cast %5 : vector<2x1x8x128xf32> to vector<2x8x128xf32>
    %c0_5 = arith.constant 0 : index
    %c0_6 = arith.constant 0 : index
    %c0_7 = arith.constant 0 : index
    %c0_8 = arith.constant 0 : index
    %7 = vector.load %arg4[%c0_5, %c0_6, %c0_7, %c0_8] : memref<2x1x8x128xf32, #tpu.memory_space<vmem>>, vector<2x1x8x128xf32>
    %8 = vector.shape_cast %7 : vector<2x1x8x128xf32> to vector<2x8x128xf32>
    %cst = arith.constant -1.000000e+00 : f32
    %9 = vector.broadcast %cst : f32 to vector<2x8x128xf32>
    %10 = arith.cmpf one, %8, %9 : vector<2x8x128xf32>
    %cst_9 = arith.constant 0.000000e+00 : f32
    %11 = vector.broadcast %cst_9 : f32 to vector<2x8x128xf32>
    %12 = arith.select %10, %6, %11 : vector<2x8x128xi1>, vector<2x8x128xf32>
    %cst_10 = arith.constant 0.000000e+00 : f32
    %13 = vector.broadcast %cst_10 : f32 to vector<2x8x128xf32>
    %14 = arith.maximumf %12, %13 : vector<2x8x128xf32>
    %15 = arith.mulf %12, %8 : vector<2x8x128xf32>
    %16 = arith.subf %14, %15 : vector<2x8x128xf32>
    %17 = math.absf %12 : vector<2x8x128xf32>
    %cst_11 = arith.constant 0.000000e+00 : f32
    %18 = vector.broadcast %cst_11 : f32 to vector<2x8x128xf32>
    %19 = arith.subf %18, %17 : vector<2x8x128xf32>
    %20 = math.exp %19 : vector<2x8x128xf32>
    %21 = math.log1p %20 : vector<2x8x128xf32>
    %22 = arith.addf %16, %21 : vector<2x8x128xf32>
    %cst_12 = arith.constant 0.000000e+00 : f32
    %23 = vector.broadcast %cst_12 : f32 to vector<2x8x128xf32>
    %24 = arith.select %10, %22, %23 : vector<2x8x128xi1>, vector<2x8x128xf32>
    %25 = arith.extui %10 : vector<2x8x128xi1> to vector<2x8x128xi32>
    %26 = arith.sitofp %25 : vector<2x8x128xi32> to vector<2x8x128xf32>
    %cst_13 = arith.constant dense<0.000000e+00> : vector<8x128xf32>
    %27 = vector.multi_reduction <add>, %24, %cst_13 [0] : vector<2x8x128xf32> to vector<8x128xf32>
    %cst_14 = arith.constant dense<0.000000e+00> : vector<8x128xf32>
    %28 = vector.multi_reduction <add>, %26, %cst_14 [0] : vector<2x8x128xf32> to vector<8x128xf32>
    %c0_15 = arith.constant 0 : index
    %c0_16 = arith.constant 0 : index
    %c0_17 = arith.constant 0 : index
    %29 = vector.load %arg5[%c0_15, %c0_16, %c0_17] : memref<1x8x128xf32, #tpu.memory_space<vmem>>, vector<1x8x128xf32>
    %30 = vector.shape_cast %29 : vector<1x8x128xf32> to vector<8x128xf32>
    %31 = arith.addf %30, %27 : vector<8x128xf32>
    %c0_18 = arith.constant 0 : index
    %c0_19 = arith.constant 0 : index
    %c0_20 = arith.constant 0 : index
    %32 = vector.load %arg5[%c0_18, %c0_19, %c0_20] : memref<1x8x128xf32, #tpu.memory_space<vmem>>, vector<1x8x128xf32>
    %33 = vector.shape_cast %32 : vector<1x8x128xf32> to vector<8x128xf32>
    %34 = vector.shape_cast %31 : vector<8x128xf32> to vector<1x8x128xf32>
    tpu.vector_store %arg5[%c0_18, %c0_19, %c0_20], %34 {strides = array<i32>} : memref<1x8x128xf32, #tpu.memory_space<vmem>>, vector<1x8x128xf32>,
    %c0_21 = arith.constant 0 : index
    %c0_22 = arith.constant 0 : index
    %c0_23 = arith.constant 0 : index
    %35 = vector.load %arg6[%c0_21, %c0_22, %c0_23] : memref<1x8x128xf32, #tpu.memory_space<vmem>>, vector<1x8x128xf32>
    %36 = vector.shape_cast %35 : vector<1x8x128xf32> to vector<8x128xf32>
    %37 = arith.addf %36, %28 : vector<8x128xf32>
    %c0_24 = arith.constant 0 : index
    %c0_25 = arith.constant 0 : index
    %c0_26 = arith.constant 0 : index
    %38 = vector.load %arg6[%c0_24, %c0_25, %c0_26] : memref<1x8x128xf32, #tpu.memory_space<vmem>>, vector<1x8x128xf32>
    %39 = vector.shape_cast %38 : vector<1x8x128xf32> to vector<8x128xf32>
    %40 = vector.shape_cast %37 : vector<8x128xf32> to vector<1x8x128xf32>
    tpu.vector_store %arg6[%c0_24, %c0_25, %c0_26], %40 {strides = array<i32>} : memref<1x8x128xf32, #tpu.memory_space<vmem>>, vector<1x8x128xf32>,
    return
  }
  func.func @transform_0(%arg0: i32, %arg1: i32, %arg2: i32) -> (i32, i32, i32, i32) {
    %c0_i32 = arith.constant 0 : i32
    %c0_i32_0 = arith.constant 0 : i32
    return %arg1, %arg0, %arg2, %c0_i32 : i32, i32, i32, i32
  }
  func.func @transform_1(%arg0: i32, %arg1: i32, %arg2: i32) -> (i32, i32, i32, i32) {
    %c0_i32 = arith.constant 0 : i32
    %c0_i32_0 = arith.constant 0 : i32
    return %arg1, %arg0, %arg2, %c0_i32 : i32, i32, i32, i32
  }
  func.func @transform_2(%arg0: i32, %arg1: i32, %arg2: i32) -> (i32, i32, i32) {
    %c0_i32 = arith.constant 0 : i32
    %c0_i32_0 = arith.constant 0 : i32
    %c0_i32_1 = arith.constant 0 : i32
    return %arg0, %c0_i32, %c0_i32_0 : i32, i32, i32
  }
  func.func @transform_3(%arg0: i32, %arg1: i32, %arg2: i32) -> (i32, i32, i32) {
    %c0_i32 = arith.constant 0 : i32
    %c0_i32_0 = arith.constant 0 : i32
    %c0_i32_1 = arith.constant 0 : i32
    return %arg0, %c0_i32, %c0_i32_0 : i32, i32, i32
  }
}

</mosaic_0001>

<llo_original>
// kernel: tpu_custom_call.1
$region0: #{tpu_custom_call.1}
  #allocation0 [shape = 'u32[]', space=smem, size = 0x4, offset = 0x4, fixed_abs, tag = 'smem constant byte address 0x4 - core index']
  #allocation1 [shape = 'u32[144,128]{1,0:T(1,128)}', space=vmem, size = 0x12000, scoped, tag = 'internal scratch']
  %s0 = inlined_call_operand.hbm [shape: f32[2,4,8,128], index: 0, kind: input, shape index: {}]
  %s1 = inlined_call_operand.hbm [shape: f32[2,4,8,128], index: 1, kind: input, shape index: {}]
  %s2 = inlined_call_operand.hbm [shape: f32[4,8,128], index: 2, kind: output, shape index: {0}]
  %s3 = inlined_call_operand.hbm [shape: f32[4,8,128], index: 3, kind: output, shape index: {1}]
  %4 = xla_tuple %s2, %s3
  %s5 = sld [smem:[#allocation0]]
  $region61: #{tpu_custom_call.1} parent=0
    _
  %s7 = ssub.s32 1, %s5
  %s8 = scalar_select 0, %s7, %s5
  $region1: #{tpu_custom_call.1} parent=0
    #allocation2 [shape = 'u8[16384]{0}', space=vmem, size = 0x4000, scoped, tag = 'input window, operand 0']
    #allocation3 [shape = 's32[2]{0}', space=sflag, size = 0x8, scoped, tag = 'scoped memory for tpu_custom_call.1']
    #allocation4 [shape = 's32[2]{0}', space=sflag, size = 0x8, scoped, tag = 'scoped memory for tpu_custom_call.1']
    #allocation5 [shape = 'u8[16384]{0}', space=vmem, size = 0x4000, scoped, tag = 'input window, operand 1']
    #allocation6 [shape = 's32[2]{0}', space=sflag, size = 0x8, scoped, tag = 'scoped memory for tpu_custom_call.1']
    #allocation7 [shape = 'u8[8192]{0}', space=vmem, size = 0x2000, scoped, tag = 'output window, operand 0']
    #allocation8 [shape = 'u8[8192]{0}', space=vmem, size = 0x2000, scoped, tag = 'output window, operand 1']
    #allocation9 [shape = 's32[2]{0}', space=sflag, size = 0x8, scoped, tag = 'scoped memory for tpu_custom_call.1']
    %9 = vsyncpa [#allocation3], 0
    %s10 = scalar_lea.sflag [#allocation3], 1
    %11 = vsyncpa %s10, 0
    %12 = vsyncpa [#allocation6], 0
    %s13 = scalar_lea.sflag [#allocation6], 1
    %14 = vsyncpa %s13, 0
    %15 = vsyncpa [#allocation4], 0
    %s16 = scalar_lea.sflag [#allocation4], 1
    %17 = vsyncpa %s16, 0
    %18 = vsyncpa [#allocation9], 0
    %s19 = scalar_lea.sflag [#allocation9], 1
    %20 = vsyncpa %s19, 0
    loop: start=0, step=1, limit=6
    $region2: #{tpu_custom_call.1} parent=1 // loop_pre_header
      _
    $region3: #{tpu_custom_call.1} parent=1 // loop_header
      %s22 = sphi 0, %s26
      %p23 = scmp.ge.s32.totalorder %s22, 6
      %s29 = sphi 0, %s48
      %s30 = sphi 0, %s44
      %s31 = sphi 0, %s40
      %s32 = sphi 0, %s29
      %s33 = sphi 0, %s30
      %s34 = sphi 0, %s31
      %s35 = sphi 0, %s32
      %s36 = sphi 0, %s33
      %s37 = sphi 0, %s34
      %s55 = sphi 0, %s57
      %s58 = sphi 0, %s55
      %s59 = sphi 0, %s58
      %s75 = sphi 0, %s59
      %s85 = sphi 0, %s87
      %s88 = sphi 0, %s85
      %s89 = sphi 0, %s88
      %s105 = sphi 0, %s89
      %s111 = sphi 0, %s113
      %s114 = sphi 0, %s111
      %s115 = sphi 0, %s114
      %s131 = sphi 0, %s115
      %s137 = sphi 0, %s139
      %s140 = sphi 0, %s137
      %s141 = sphi 0, %s140
      %s157 = sphi 0, %s141
    $region4: #{tpu_custom_call.1} parent=1 // loop_header_branch
      %25 = sbr.rel (%p23) target = $region8
    $region5: #{tpu_custom_call.1} parent=1 // loop_body
      %s27 = ssub.s32 %s22, 1
      %s28 = ssub.s32 %s22, 2
      %s38 = sadd.s32 1, %s31
      %p39 = scmp.ge.s32.totalorder %s38, 1
      %s40 = scalar_select %p39, 0, %s38
      %s41 = sadd.s32 1, %s30
      %s42 = scalar_select %p39, %s41, %s30
      %p43 = scmp.ge.s32.totalorder %s42, 1
      %s44 = scalar_select %p43, 0, %s42
      %s45 = sadd.s32 1, %s29
      %s46 = scalar_select %p43, %s45, %s29
      %p47 = scmp.ge.s32.totalorder %s46, 4
      %s48 = scalar_select %p47, 0, %s46
      %s49 = ssub.s32 %s30, %s44
      %s50 = ssub.s32 %s29, %s48
      %s51 = sor.u32 %s49, %s50
      %s52 = ssub.s32 %s31, %s40
      %s53 = sor.u32 %s51, %s52
      %p54 = scmp.eq.s32.totalorder %s53, 0
      %s56 = sadd.s32 %s55, 1
      %s57 = scalar_select %p54, %s55, %s56
      %p60 = pneg %p54
      %p61 = scmp.eq.s32.totalorder %s22, 3
      %p62 = por %p60, %p61
      %p63 = scmp.ne.s32.totalorder %s55, %s58
      %p64 = scmp.eq.s32.totalorder %s22, 0
      %p65 = por %p63, %p64
      %p66 = scmp.ne.s32.totalorder %s55, %s58
      %p67 = scmp.eq.s32.totalorder %s27, 3
      %p68 = por %p66, %p67
      %p69 = scmp.ne.s32.totalorder %s58, %s59
      %p70 = scmp.eq.s32.totalorder %s27, 0
      %p71 = por %p69, %p70
      %p72 = scmp.ne.s32.totalorder %s58, %s59
      %p73 = scmp.eq.s32.totalorder %s28, 3
      %p74 = por %p72, %p73
      %p76 = scmp.ne.s32.totalorder %s59, %s75
      %p77 = scmp.eq.s32.totalorder %s28, 0
      %p78 = por %p76, %p77
      %s79 = ssub.s32 %s30, %s44
      %s80 = ssub.s32 %s29, %s48
      %s81 = sor.u32 %s79, %s80
      %s82 = ssub.s32 %s31, %s40
      %s83 = sor.u32 %s81, %s82
      %p84 = scmp.eq.s32.totalorder %s83, 0
      %s86 = sadd.s32 %s85, 1
      %s87 = scalar_select %p84, %s85, %s86
      %p90 = pneg %p84
      %p91 = scmp.eq.s32.totalorder %s22, 3
      %p92 = por %p90, %p91
      %p93 = scmp.ne.s32.totalorder %s85, %s88
      %p94 = scmp.eq.s32.totalorder %s22, 0
      %p95 = por %p93, %p94
      %p96 = scmp.ne.s32.totalorder %s85, %s88
      %p97 = scmp.eq.s32.totalorder %s27, 3
      %p98 = por %p96, %p97
      %p99 = scmp.ne.s32.totalorder %s88, %s89
      %p100 = scmp.eq.s32.totalorder %s27, 0
      %p101 = por %p99, %p100
      %p102 = scmp.ne.s32.totalorder %s88, %s89
      %p103 = scmp.eq.s32.totalorder %s28, 3
      %p104 = por %p102, %p103
      %p106 = scmp.ne.s32.totalorder %s89, %s105
      %p107 = scmp.eq.s32.totalorder %s28, 0
      %p108 = por %p106, %p107
      %s109 = ssub.s32 %s29, %s48
      %p110 = scmp.eq.s32.totalorder %s109, 0
      %s112 = sadd.s32 %s111, 1
      %s113 = scalar_select %p110, %s111, %s112
      %p116 = pneg %p110
      %p117 = scmp.eq.s32.totalorder %s22, 3
      %p118 = por %p116, %p117
      %p119 = scmp.ne.s32.totalorder %s111, %s114
      %p120 = scmp.eq.s32.totalorder %s22, 0
      %p121 = por %p119, %p120
      %p122 = scmp.ne.s32.totalorder %s111, %s114
      %p123 = scmp.eq.s32.totalorder %s27, 3
      %p124 = por %p122, %p123
      %p125 = scmp.ne.s32.totalorder %s114, %s115
      %p126 = scmp.eq.s32.totalorder %s27, 0
      %p127 = por %p125, %p126
      %p128 = scmp.ne.s32.totalorder %s114, %s115
      %p129 = scmp.eq.s32.totalorder %s28, 3
      %p130 = por %p128, %p129
      %p132 = scmp.ne.s32.totalorder %s115, %s131
      %p133 = scmp.eq.s32.totalorder %s28, 0
      %p134 = por %p132, %p133
      %s135 = ssub.s32 %s29, %s48
      %p136 = scmp.eq.s32.totalorder %s135, 0
      %s138 = sadd.s32 %s137, 1
      %s139 = scalar_select %p136, %s137, %s138
      %p142 = pneg %p136
      %p143 = scmp.eq.s32.totalorder %s22, 3
      %p144 = por %p142, %p143
      %p145 = scmp.ne.s32.totalorder %s137, %s140
      %p146 = scmp.eq.s32.totalorder %s22, 0
      %p147 = por %p145, %p146
      %p148 = scmp.ne.s32.totalorder %s137, %s140
      %p149 = scmp.eq.s32.totalorder %s27, 3
      %p150 = por %p148, %p149
      %p151 = scmp.ne.s32.totalorder %s140, %s141
      %p152 = scmp.eq.s32.totalorder %s27, 0
      %p153 = por %p151, %p152
      %p154 = scmp.ne.s32.totalorder %s140, %s141
      %p155 = scmp.eq.s32.totalorder %s28, 3
      %p156 = por %p154, %p155
      %p158 = scmp.ne.s32.totalorder %s141, %s157
      %p159 = scmp.eq.s32.totalorder %s28, 0
      %p160 = por %p158, %p159
      %p161 = scmp.le.s32.totalorder 1, %s22
      %p162 = scmp.lt.s32.totalorder %s22, 5
      %p163 = pnand %p161, %p162
      %p164 = pneg %p163
      // Predicated region
      $region9: #{tpu_custom_call.1} parent=5 // pred_check
        _
      $region10: #{tpu_custom_call.1} parent=5 // pred_check_branch
        %166 = sbr.rel (%p163) target = $region12
      $region11: #{tpu_custom_call.1} parent=5 // pred_region
        %s167 = ssub.s32 %s22, 1
      $region12: #{tpu_custom_call.1} parent=5 // pred_fallthru
        _
      %p168 = scmp.lt.s32.totalorder %s22, 4
      // Predicated region
      $region13: #{tpu_custom_call.1} parent=5 // pred_check
        %p169 = pneg %p168
      $region14: #{tpu_custom_call.1} parent=5 // pred_check_branch
        %171 = sbr.rel (%p169) target = $region16
      $region15: #{tpu_custom_call.1} parent=5 // pred_region
        // Predicated region
        $region17: #{tpu_custom_call.1} parent=15 // pred_check
          %p172 = pneg %p65
        $region18: #{tpu_custom_call.1} parent=15 // pred_check_branch
          %174 = sbr.rel (%p172) target = $region20
        $region19: #{tpu_custom_call.1} parent=15 // pred_region
          %s175 = sand.u32 %s55, 1
          %s176 = scalar_lea.sflag [#allocation3], %s175
          %s177 = sand.u32 %s55, 1
          %s178 = smul.addr %s177, 16
          %s179 = scalar_lea.vmem [#allocation2], %s178
          %s180 = smul.u32 2, %s30
          %s182 = ssub.s32 256, 256
          %183 = vsyncadd %s176, %s182
          %s184 = sadd.s32 %s31, %s29
          %s185 = smul.addr %s180, 4
          %s186 = sadd.s32 %s184, %s185
          %s187 = smul.addr %s186, 128
          %s188 = scalar_lea.hbm %s0, %s187
          %s189 = sshll.u32 %s179, 4
          %s190 = int_to_ptr.vmem [resolvable:$true] %s189
          %195 = dma.hbm_to_vmem [thread:$0]  %s188, 256, %s190, %s176, 512, 128, 8
        $region20: #{tpu_custom_call.1} parent=15 // pred_fallthru
          _
        // Predicated region
        $region21: #{tpu_custom_call.1} parent=15 // pred_check
          %p196 = pneg %p95
        $region22: #{tpu_custom_call.1} parent=15 // pred_check_branch
          %198 = sbr.rel (%p196) target = $region24
        $region23: #{tpu_custom_call.1} parent=15 // pred_region
          %s199 = sand.u32 %s85, 1
          %s200 = scalar_lea.sflag [#allocation6], %s199
          %s201 = sand.u32 %s85, 1
          %s202 = smul.addr %s201, 16
          %s203 = scalar_lea.vmem [#allocation5], %s202
          %s204 = smul.u32 2, %s30
          %s206 = ssub.s32 256, 256
          %207 = vsyncadd %s200, %s206
          %s208 = sadd.s32 %s31, %s29
          %s209 = smul.addr %s204, 4
          %s210 = sadd.s32 %s208, %s209
          %s211 = smul.addr %s210, 128
          %s212 = scalar_lea.hbm %s1, %s211
          %s213 = sshll.u32 %s203, 4
          %s214 = int_to_ptr.vmem [resolvable:$true] %s213
          %219 = dma.hbm_to_vmem [thread:$0]  %s212, 256, %s214, %s200, 512, 128, 8
        $region24: #{tpu_custom_call.1} parent=15 // pred_fallthru
          _
      $region16: #{tpu_custom_call.1} parent=5 // pred_fallthru
        _
      %p220 = scmp.le.s32.totalorder 1, %s22
      %p221 = scmp.lt.s32.totalorder %s22, 5
      %p222 = pnand %p220, %p221
      %p223 = pneg %p222
      // Predicated region
      $region25: #{tpu_custom_call.1} parent=5 // pred_check
        _
      $region26: #{tpu_custom_call.1} parent=5 // pred_check_branch
        %225 = sbr.rel (%p222) target = $region28
      $region27: #{tpu_custom_call.1} parent=5 // pred_region
        %s226 = ssub.s32 %s22, 1
        %s227 = sand.u32 %s58, 1
        %s228 = scalar_lea.sflag [#allocation3], %s227
        %s229 = sand.u32 %s58, 1
        %s230 = smul.addr %s229, 16
        %s231 = scalar_lea.vmem [#allocation2], %s230
        // Predicated region
        $region29: #{tpu_custom_call.1} parent=27 // pred_check
          %p232 = pneg %p71
        $region30: #{tpu_custom_call.1} parent=27 // pred_check_branch
          %234 = sbr.rel (%p232) target = $region32
        $region31: #{tpu_custom_call.1} parent=27 // pred_region
          %235 = dma.done %s228, 256
        $region32: #{tpu_custom_call.1} parent=27 // pred_fallthru
          _
        %s236 = sand.u32 %s88, 1
        %s237 = scalar_lea.sflag [#allocation6], %s236
        %s238 = sand.u32 %s88, 1
        %s239 = smul.addr %s238, 16
        %s240 = scalar_lea.vmem [#allocation5], %s239
        // Predicated region
        $region33: #{tpu_custom_call.1} parent=27 // pred_check
          %p241 = pneg %p101
        $region34: #{tpu_custom_call.1} parent=27 // pred_check_branch
          %243 = sbr.rel (%p241) target = $region36
        $region35: #{tpu_custom_call.1} parent=27 // pred_region
          %244 = dma.done %s237, 256
        $region36: #{tpu_custom_call.1} parent=27 // pred_fallthru
          _
        %s245 = sand.u32 %s58, 1
        %s246 = scalar_lea.sflag [#allocation3], %s245
        %s247 = sand.u32 %s58, 1
        %s248 = smul.addr %s247, 16
        %s249 = scalar_lea.vmem [#allocation2], %s248
        %p250 = pneg %p71
        %p251 = pneg %p68
        %s252 = sand.u32 %s88, 1
        %s253 = scalar_lea.sflag [#allocation6], %s252
        %s254 = sand.u32 %s88, 1
        %s255 = smul.addr %s254, 16
        %s256 = scalar_lea.vmem [#allocation5], %s255
        %p257 = pneg %p101
        %p258 = pneg %p98
        %p259 = pneg %p127
        %p260 = pneg %p124
        %s261 = sand.u32 %s114, 1
        %s262 = scalar_lea.sflag [#allocation4], %s261
        %s263 = sand.u32 %s114, 1
        %s264 = smul.addr %s263, 8
        %s265 = scalar_lea.vmem [#allocation7], %s264
        %p266 = pneg %p153
        %p267 = pneg %p150
        %s268 = sand.u32 %s140, 1
        %s269 = scalar_lea.sflag [#allocation9], %s268
        %s270 = sand.u32 %s140, 1
        %s271 = smul.addr %s270, 8
        %s272 = scalar_lea.vmem [#allocation8], %s271
        %s273 = smul.u32 2, %s33
        %s274 = smul.u32 2, %s33
        %p275 = scmp.eq.s32.totalorder %s33, 0
        %p276 = scmp.eq.s32.totalorder %s34, 0
        %p277 = pnand %p275, %p276
        %p278 = pneg %p277
        // Predicated region
        $region37: #{tpu_custom_call.1} parent=27 // pred_check
          _
        $region38: #{tpu_custom_call.1} parent=27 // pred_check_branch
          %280 = sbr.rel (%p277) target = $region40
        $region39: #{tpu_custom_call.1} parent=27 // pred_region
          %281 = vst [vmem:[%s265] sm:$0xff] 0.0
          %282 = vst [vmem:[%s272] sm:$0xff] 0.0
        $region40: #{tpu_custom_call.1} parent=27 // pred_fallthru
          _
        %v283 = vld [vmem:[%s231] sm:$0xff]
        %v284 = vld [vmem:[%s231 + $0x8] sm:$0xff]
        %v285 = vld [vmem:[%s240] sm:$0xff]
        %v286 = vld [vmem:[%s240 + $0x8] sm:$0xff]
        %vm287 = vcmp.ne.f32.partialorder %v285, -1.0
        %vm288 = vcmp.ne.f32.partialorder %v286, -1.0
        %v289 = vsel %vm287, %v283, 0.0
        %v290 = vsel %vm288, %v284, 0.0
        %v291 = vmax.f32 %v289, 0.0
        %v292 = vmax.f32 %v290, 0.0
        %v293 = vmul.f32 %v289, %v285
        %v294 = vmul.f32 %v290, %v286
        %v295 = vsub.f32 %v291, %v293
        %v296 = vsub.f32 %v292, %v294
        %v297 = vand.u32 2147483647, %v289
        %v298 = vand.u32 2147483647, %v290
        %v299 = vsub.f32 0.0, %v297
        %v300 = vsub.f32 0.0, %v298
        %v301 = vmul.f32 %v299, 1.442695
        %v302 = vpow.pop %v301
        %v303 = vmul.f32 %v300, 1.442695
        %v304 = vpow.pop %v303
        %v305 = vadd.f32 %v302, 1.0
        %v306 = vlog2.pop %v305
        %v307 = vmul.f32 %v306, 0.6931472
        %v308 = vmul.f32 -0.5, %v302
        %v309 = vadd.f32 %v308, 1.0
        %v310 = vmul.f32 %v309, %v302
        %v311 = vand.u32 2147483647, %v302
        %vm312 = vcmp.lt.f32.partialorder %v311, 0.0004427343
        %v313 = vsel %vm312, %v310, %v307
        %v314 = vadd.f32 %v304, 1.0
        %v315 = vlog2.pop %v314
        %v316 = vmul.f32 %v315, 0.6931472
        %v317 = vmul.f32 -0.5, %v304
        %v318 = vadd.f32 %v317, 1.0
        %v319 = vmul.f32 %v318, %v304
        %v320 = vand.u32 2147483647, %v304
        %vm321 = vcmp.lt.f32.partialorder %v320, 0.0004427343
        %v322 = vsel %vm321, %v319, %v316
        %v323 = vadd.f32 %v295, %v313
        %v324 = vadd.f32 %v296, %v322
        %v325 = vsel %vm287, %v323, 0.0
        %v326 = vsel %vm288, %v324, 0.0
        %v327 = vsel %vm287, 1, 0
        %v328 = vsel %vm288, 1, 0
        %v329 = vcvt.s32.f32 %v327
        %v330 = vcvt.s32.f32 %v328
        %v331 = vadd.f32 %v325, %v326
        %v332 = vadd.f32 %v329, %v330
        %v333 = vld [vmem:[%s265] sm:$0xff]
        %v334 = vadd.f32 %v333, %v331
        %335 = vst [vmem:[%s265] sm:$0xff] %v334
        %v336 = vld [vmem:[%s272] sm:$0xff]
        %v337 = vadd.f32 %v336, %v332
        %338 = vst [vmem:[%s272] sm:$0xff] %v337
        %s339 = sand.u32 %s114, 1
        %s340 = scalar_lea.sflag [#allocation4], %s339
        %s341 = sand.u32 %s114, 1
        %s342 = smul.addr %s341, 8
        %s343 = scalar_lea.vmem [#allocation7], %s342
        %s344 = sand.u32 %s140, 1
        %s345 = scalar_lea.sflag [#allocation9], %s344
        %s346 = sand.u32 %s140, 1
        %s347 = smul.addr %s346, 8
        %s348 = scalar_lea.vmem [#allocation8], %s347
        // Predicated region
        $region41: #{tpu_custom_call.1} parent=27 // pred_check
          %p349 = pneg %p124
        $region42: #{tpu_custom_call.1} parent=27 // pred_check_branch
          %351 = sbr.rel (%p349) target = $region44
        $region43: #{tpu_custom_call.1} parent=27 // pred_region
          %s353 = ssub.s32 128, 128
          %354 = vsyncadd %s340, %s353
          %s355 = smul.addr %s32, 128
          %s356 = scalar_lea.hbm %s2, %s355
          %s358 = sshll.u32 %s343, 4
          %s359 = int_to_ptr.vmem [resolvable:$true] %s358
          %361 = dma.vmem_to_hbm [thread:$0]  %s359, 128, %s356, %s340
        $region44: #{tpu_custom_call.1} parent=27 // pred_fallthru
          _
        // Predicated region
        $region45: #{tpu_custom_call.1} parent=27 // pred_check
          %p362 = pneg %p150
        $region46: #{tpu_custom_call.1} parent=27 // pred_check_branch
          %364 = sbr.rel (%p362) target = $region48
        $region47: #{tpu_custom_call.1} parent=27 // pred_region
          %s366 = ssub.s32 128, 128
          %367 = vsyncadd %s345, %s366
          %s368 = smul.addr %s32, 128
          %s369 = scalar_lea.hbm %s3, %s368
          %s371 = sshll.u32 %s348, 4
          %s372 = int_to_ptr.vmem [resolvable:$true] %s371
          %374 = dma.vmem_to_hbm [thread:$0]  %s372, 128, %s369, %s345
        $region48: #{tpu_custom_call.1} parent=27 // pred_fallthru
          _
      $region28: #{tpu_custom_call.1} parent=5 // pred_fallthru
        _
      %p375 = scmp.le.s32.totalorder 2, %s22
      // Predicated region
      $region49: #{tpu_custom_call.1} parent=5 // pred_check
        %p376 = pneg %p375
      $region50: #{tpu_custom_call.1} parent=5 // pred_check_branch
        %378 = sbr.rel (%p376) target = $region52
      $region51: #{tpu_custom_call.1} parent=5 // pred_region
        %s379 = ssub.s32 %s22, 2
        // Predicated region
        $region53: #{tpu_custom_call.1} parent=51 // pred_check
          %p380 = pneg %p130
        $region54: #{tpu_custom_call.1} parent=51 // pred_check_branch
          %382 = sbr.rel (%p380) target = $region56
        $region55: #{tpu_custom_call.1} parent=51 // pred_region
          %s383 = sand.u32 %s115, 1
          %s384 = scalar_lea.sflag [#allocation4], %s383
          %s385 = sand.u32 %s115, 1
          %s386 = smul.addr %s385, 8
          %s387 = scalar_lea.vmem [#allocation7], %s386
          %388 = dma.done %s384, 128
        $region56: #{tpu_custom_call.1} parent=51 // pred_fallthru
          _
        // Predicated region
        $region57: #{tpu_custom_call.1} parent=51 // pred_check
          %p389 = pneg %p156
        $region58: #{tpu_custom_call.1} parent=51 // pred_check_branch
          %391 = sbr.rel (%p389) target = $region60
        $region59: #{tpu_custom_call.1} parent=51 // pred_region
          %s392 = sand.u32 %s141, 1
          %s393 = scalar_lea.sflag [#allocation9], %s392
          %s394 = sand.u32 %s141, 1
          %s395 = smul.addr %s394, 8
          %s396 = scalar_lea.vmem [#allocation8], %s395
          %397 = dma.done %s393, 128
        $region60: #{tpu_custom_call.1} parent=51 // pred_fallthru
          _
      $region52: #{tpu_custom_call.1} parent=5 // pred_fallthru
        _
    $region6: #{tpu_custom_call.1} parent=1 // loop_footer
      %s26 = sadd.s32 1, %s22
    $region7: #{tpu_custom_call.1} parent=1 // loop_footer_branch
      %21 = sbr.rel target = $region3
    $region8: #{tpu_custom_call.1} parent=1 // loop_exit
      _
    %398 = vsyncpa [#allocation3], 1
    %s399 = scalar_lea.sflag [#allocation3], 1
    %400 = vsyncpa %s399, 1
    %401 = vsyncpa [#allocation6], 1
    %s402 = scalar_lea.sflag [#allocation6], 1
    %403 = vsyncpa %s402, 1
    %404 = vsyncpa [#allocation4], 1
    %s405 = scalar_lea.sflag [#allocation4], 1
    %406 = vsyncpa %s405, 1
    %407 = vsyncpa [#allocation9], 1
    %s408 = scalar_lea.sflag [#allocation9], 1
    %409 = vsyncpa %s408, 1

</llo_original>
